<compile_context>
chip_gen: v7x
topology: tpu7x:2x2x1
jax: 0.10.0
libtpu: 0.0.40
codegen_flags: <defaults>
</compile_context>

<pallas_src>
import jax
import jax.numpy as jnp
from jax.experimental import pallas as pl
from jax.experimental.pallas import tpu as pltpu

# ----------------------------- model dims (small, synthetic) ----------------
B = 2          # batch (dialogues)
T = 16         # tokenized sequence length (before <bos>)
S = T + 1      # sequence length after <bos> prepend
H = 128        # llama hidden size
DV = 256       # imagebind visual/audio hidden size
V = 512        # vocab size (already includes <Vid>, <Aud>)
N_AUD = 2      # utterances with audio per dialogue
N_VID = 2      # utterances with video per dialogue

BOS_ID = 1
AUD_ID = V - 1   # '<Aud>'
VID_ID = V - 2   # '<Vid>'
IGNORE = -100

# Explicit scoped-VMEM cap: above v5e's 16 MiB default, safely below v7x's
# 64 MiB physical VMEM.  Tiles below are sized well under this on every gen.
VMEM_LIMIT = 32 * 1024 * 1024


def _round_up(x, m):
    return (x + m - 1) // m * m


def _pad2(a, rows, cols, dtype):
    a = a.astype(dtype)
    r, c = a.shape
    if (r, c) == (rows, cols):
        return a
    return jnp.zeros((rows, cols), dtype).at[:r, :c].set(a)


def _pad_rows_const(a, rows, fill):
    r = a.shape[0]
    if r == rows:
        return a
    return jnp.concatenate(
        [a, jnp.full((rows - r,) + a.shape[1:], fill, a.dtype)], axis=0)


# ----------------------------- tiled linear (llama_proj) --------------------
def _linear_kernel(x_ref, w_ref, b_ref, o_ref, acc_ref):
    k = pl.program_id(2)

    @pl.when(k == 0)
    def _():
        acc_ref[...] = jnp.zeros_like(acc_ref)

    acc_ref[...] += jnp.dot(x_ref[...], w_ref[...],
                            preferred_element_type=jnp.float32)

    @pl.when(k == pl.num_programs(2) - 1)
    def _():
        o_ref[...] = (acc_ref[...] + b_ref[...]).astype(o_ref.dtype)


def linear(x, wt, b, *, tm=256, tn=256, tk=512, out_dtype=jnp.bfloat16):
    """y = x @ wt + b.   x:[M,K], wt:[K,N] (pre-transposed), b:[N] f32."""
    m, kdim = x.shape
    n = wt.shape[1]
    tm = min(tm, _round_up(m, 8))
    tn = min(tn, _round_up(n, 128))
    tk = min(tk, _round_up(kdim, 128))
    mp, kp, np_ = _round_up(m, tm), _round_up(kdim, tk), _round_up(n, tn)

    x_p = _pad2(x, mp, kp, jnp.bfloat16)
    w_p = _pad2(wt, kp, np_, jnp.bfloat16)
    b_p = _pad2(b.reshape(1, n), 1, np_, jnp.float32)

    grid = (mp // tm, np_ // tn, kp // tk)
    out = pl.pallas_call(
        _linear_kernel,
        out_shape=jax.ShapeDtypeStruct((mp, np_), out_dtype),
        grid_spec=pltpu.PrefetchScalarGridSpec(
            num_scalar_prefetch=0,
            grid=grid,
            in_specs=[
                pl.BlockSpec((tm, tk), lambda i, j, k: (i, k)),
                pl.BlockSpec((tk, tn), lambda i, j, k: (k, j)),
                pl.BlockSpec((1, tn), lambda i, j, k: (0, j)),
            ],
            out_specs=pl.BlockSpec((tm, tn), lambda i, j, k: (i, j)),
            scratch_shapes=[pltpu.VMEM((tm, tn), jnp.float32)],
        ),
        compiler_params=pltpu.CompilerParams(
            dimension_semantics=("parallel", "parallel", "arbitrary"),
            vmem_limit_bytes=VMEM_LIMIT,
        ),
        cost_estimate=pl.CostEstimate(
            flops=2 * mp * kp * np_,
            transcendentals=0,
            bytes_accessed=(2 * mp * kp + 2 * kp * np_ + 4 * np_
                            + jnp.dtype(out_dtype).itemsize * mp * np_),
        ),
    )(x_p, w_p, b_p)
    return out[:m, :n]


# -------------------- fused lm-head + cross-entropy + gen_acc ----------------
def _lmhead_loss_kernel(x_ref, wt_ref, b_ref, lab_ref, acclab_ref, stats_ref):
    """x:[TM,H] bf16, wt:[H,V] bf16 (resident across row tiles), b:[1,V] f32,
    lab:[TM,1] i32 shifted labels (IGNORE at last pos / pad rows),
    acclab:[TM,1] i32 labels restricted to the gen_acc window (else IGNORE),
    stats: SMEM f32[4] = [loss_sum, loss_cnt, correct_sum, acc_valid_sum]."""
    i = pl.program_id(0)

    @pl.when(i == 0)
    def _():
        stats_ref[0] = 0.0
        stats_ref[1] = 0.0
        stats_ref[2] = 0.0
        stats_ref[3] = 0.0

    # Logits tile computed on the MXU and consumed in-register / in-VMEM;
    # never written to HBM (no lm-head -> slice -> loss round trip).
    logits = (jnp.dot(x_ref[...], wt_ref[...],
                      preferred_element_type=jnp.float32) + b_ref[...])
    labels = lab_ref[...]          # [TM, 1] i32  (VMEM: needed as vectors for
    acc_labels = acclab_ref[...]   # [TM, 1] i32   the lane-wise compares below)
    n, v = logits.shape

    vocab_iota = jax.lax.broadcasted_iota(jnp.int32, (n, v), 1)
    m = jnp.max(logits, axis=-1, keepdims=True)
    # argmax reuses m (lowest index on ties); no second max pass over V.
    chosen = jnp.min(jnp.where(logits >= m, vocab_iota, v), axis=-1,
                     keepdims=True)
    sum_exp = jnp.sum(jnp.exp(logits - m), axis=-1, keepdims=True)
    lse = m + jnp.log(sum_exp)
    label_logit = jnp.sum(jnp.where(vocab_iota == labels, logits, 0.0),
                          axis=-1, keepdims=True)
    nll = lse - label_logit                         # [TM, 1]

    valid = labels != IGNORE                        # HF CE ignore_index
    acc_valid = acc_labels != IGNORE
    correct = (chosen == acc_labels) & acc_valid

    stats_ref[0] += jnp.sum(jnp.where(valid, nll, 0.0))
    stats_ref[1] += jnp.sum(valid.astype(jnp.float32))
    stats_ref[2] += jnp.sum(correct.astype(jnp.float32))
    stats_ref[3] += jnp.sum(acc_valid.astype(jnp.float32))


def lmhead_loss(x, wt, b, labels, acc_labels, *, tm=256):
    """x:[M,H] bf16, wt:[H,V] bf16, b:[V] f32, labels/acc_labels:[M,1] i32."""
    m, h = x.shape
    v = wt.shape[1]
    tm = min(tm, _round_up(m, 8))
    mp = _round_up(m, tm)

    x_p = _pad2(x, mp, h, jnp.bfloat16)
    lab_p = _pad_rows_const(labels.astype(jnp.int32), mp, IGNORE)
    acc_p = _pad_rows_const(acc_labels.astype(jnp.int32), mp, IGNORE)

    grid = (mp // tm,)
    return pl.pallas_call(
        _lmhead_loss_kernel,
        out_shape=jax.ShapeDtypeStruct((4,), jnp.float32),
        grid_spec=pltpu.PrefetchScalarGridSpec(
            num_scalar_prefetch=0,
            grid=grid,
            in_specs=[
                pl.BlockSpec((tm, h), lambda i: (i, 0)),
                pl.BlockSpec((h, v), lambda i: (0, 0)),   # weight stays resident
                pl.BlockSpec((1, v), lambda i: (0, 0)),
                pl.BlockSpec((tm, 1), lambda i: (i, 0)),
                pl.BlockSpec((tm, 1), lambda i: (i, 0)),
            ],
            # Stats accumulate in a resident SMEM output across row tiles, so
            # the row axis must be "arbitrary" (sequential accumulation).
            out_specs=pl.BlockSpec(memory_space=pltpu.MemorySpace.SMEM),
        ),
        compiler_params=pltpu.CompilerParams(
            dimension_semantics=("arbitrary",),
            vmem_limit_bytes=VMEM_LIMIT,
        ),
        cost_estimate=pl.CostEstimate(
            flops=2 * mp * h * v,
            transcendentals=mp * v,
            bytes_accessed=2 * mp * h + 2 * h * v + 4 * v + 8 * mp + 16,
        ),
    )(x_p, wt.astype(jnp.bfloat16), b.reshape(1, v).astype(jnp.float32),
      lab_p, acc_p)


# ----------------------------- JAX glue (prompt_wrap etc.) ------------------
def scatter_modal(embeds, ids, modal_id, modal_embs):
    """Replace embeddings where ids == modal_id with the p-th modal embedding
    (p = running count of modal tokens), matching the torch loop."""
    is_m = ids == modal_id                                     # [B, T]
    k = jnp.cumsum(is_m.astype(jnp.int32), axis=1) - 1
    k = jnp.clip(k, 0, modal_embs.shape[1] - 1)
    gathered = jnp.take_along_axis(modal_embs, k[..., None], axis=1)  # [B,T,H]
    return jnp.where(is_m[..., None], gathered, embeds)


@jax.jit
def merg_forward(params, input_ids, target_ids, attention_mask,
                 audio_raw, video_raw):
    b, t = input_ids.shape
    s = t + 1

    # encode_audio / encode_video share llama_proj -> ONE merged Pallas matmul
    modal_raw = jnp.concatenate(
        [audio_raw.reshape(b * N_AUD, DV), video_raw.reshape(b * N_VID, DV)],
        axis=0)
    modal_emb = linear(modal_raw, params["proj_wt"], params["proj_b"],
                       out_dtype=jnp.bfloat16)
    aud_embs = modal_emb[: b * N_AUD].reshape(b, N_AUD, H)
    vid_embs = modal_emb[b * N_AUD:].reshape(b, N_VID, H)

    # prompt_wrap
    p_after = params["emb"][input_ids]                          # embed_tokens
    p_after = scatter_modal(p_after, input_ids, AUD_ID, aud_embs)
    p_after = scatter_modal(p_after, input_ids, VID_ID, vid_embs)
    bos_emb = params["emb"][jnp.full((b, 1), BOS_ID, jnp.int32)]
    inputs_embeds = jnp.concatenate([bos_emb, p_after], axis=1)  # [B, S, H] bf16
    attention_mask = jnp.concatenate(
        [jnp.ones((b, 1), attention_mask.dtype), attention_mask], axis=1)
    targets = jnp.concatenate(
        [jnp.full((b, 1), IGNORE, jnp.int32), target_ids.astype(jnp.int32)],
        axis=1)                                                  # [B, S]

    # Shifted labels (HF causal-LM shift); last position has no next token.
    labels_next = jnp.concatenate(
        [targets[:, 1:], jnp.full((b, 1), IGNORE, jnp.int32)], axis=1)  # [B,S]
    # gen_acc window: chosen_tokens[:, 1:-1] vs labels[:, 2:]  ==  positions
    # 1..S-2 predicting labels 2..S-1.  Encode it by IGNORE-ing labels outside.
    pos = jnp.arange(s, dtype=jnp.int32)[None, :]
    acc_labels = jnp.where((pos >= 1) & (pos <= s - 2), labels_next, IGNORE)

    # TODO(synk): full LLaMA+LoRA decoder not implementable; fused lm-head +
    # loss/acc kernel over the wrapped embeddings is the stand-in.
    stats = lmhead_loss(inputs_embeds.reshape(b * s, H),
                        params["lm_head_wt"], params["lm_head_b"],
                        labels_next.reshape(b * s, 1),
                        acc_labels.reshape(b * s, 1))

    loss = stats[0] / jnp.maximum(stats[1], 1.0)
    gen_acc = stats[2] / (stats[3] + 1.0)   # intentional +1.0: mirrors reference
    return {"loss": loss, "gen_acc": gen_acc}


# ----------------------------- deterministic setup ---------------------------
def init_params(key):
    k1, k2, k3, k4 = jax.random.split(key, 4)
    # torch nn.Linear layout is [out, in]; transpose ONCE here (no per-forward
    # transpose) and store matmul operands in bf16 (halved DMA, f32 accumulate).
    proj_w = 0.02 * jax.random.normal(k2, (H, DV), jnp.float32)     # [out, in]
    lm_head_w = 0.02 * jax.random.normal(k4, (V, H), jnp.float32)   # [out, in]
    return {
        "emb":        (0.02 * jax.random.normal(k1, (V, H), jnp.float32)
                       ).astype(jnp.bfloat16),
        "proj_wt":    jnp.transpose(proj_w).astype(jnp.bfloat16),    # [DV, H]
        "proj_b":     0.02 * jax.random.normal(k3, (H,), jnp.float32),
        "lm_head_wt": jnp.transpose(lm_head_w).astype(jnp.bfloat16),  # [H, V]
        "lm_head_b":  jnp.zeros((V,), jnp.float32),
    }


if __name__ == "__main__":
    key = jax.random.PRNGKey(0)
    kp, ki, ka, kv = jax.random.split(key, 4)
    params = init_params(kp)

    input_ids = jax.random.randint(ki, (B, T), 2, V - 2, jnp.int32)
    # place <Aud> / <Vid> special tokens (N_AUD and N_VID per dialogue)
    input_ids = input_ids.at[:, 3].set(AUD_ID).at[:, 9].set(AUD_ID)
    input_ids = input_ids.at[:, 4].set(VID_ID).at[:, 10].set(VID_ID)

    # mask the "prompt" part of the targets like process_batch_text_stream would
    target_ids = jnp.where(jnp.arange(T)[None, :] < 5, IGNORE, input_ids)
    attention_mask = jnp.ones((B, T), jnp.int32)

    audio_raw = jax.random.normal(ka, (B, N_AUD, DV), jnp.float32)
    video_raw = jax.random.normal(kv, (B, N_VID, DV), jnp.float32)

    out = merg_forward(params, input_ids, target_ids, attention_mask,
                       audio_raw, video_raw)
    jax.block_until_ready(out)
    assert jnp.isfinite(out["loss"]) and jnp.isfinite(out["gen_acc"])
    print("KERNEL_OK")
</pallas_src>

<mosaic_0001>
module attributes {stable_mosaic.version = 11 : i64} {
  func.func @_linear_kernel(%arg0: i32, %arg1: i32, %arg2: i32, %arg3: memref<8x256xbf16, #tpu.memory_space<vmem>>, %arg4: memref<256x128xbf16, #tpu.memory_space<vmem>>, %arg5: memref<1x128xf32, #tpu.memory_space<vmem>>, %arg6: memref<8x128xbf16, #tpu.memory_space<vmem>>, %arg7: memref<8x128xf32, #tpu.memory_space<vmem>>) attributes {dimension_semantics = [#tpu.dimension_semantics<parallel>, #tpu.dimension_semantics<parallel>, #tpu.dimension_semantics<arbitrary>], iteration_bounds = array<i64: 1, 1, 1>, scalar_prefetch = 0 : i64, scratch_operands = 1 : i64, tpu.core_type = #tpu.core_type<tc>, window_params = [{transform_indices = @transform_0, window_bounds = array<i64: 8, 256>}, {transform_indices = @transform_1, window_bounds = array<i64: 256, 128>}, {transform_indices = @transform_2, window_bounds = array<i64: 1, 128>}, {transform_indices = @transform_3, window_bounds = array<i64: 8, 128>}]} {
    %c0_i32 = arith.constant 0 : i32
    %0 = arith.cmpi eq, %arg2, %c0_i32 : i32
    %1 = arith.extui %0 : i1 to i32
    %c0_i32_0 = arith.constant 0 : i32
    %2 = arith.cmpi ne, %1, %c0_i32_0 : i32
    scf.if %2 {
      %cst_10 = arith.constant 0.000000e+00 : f32
      %12 = vector.broadcast %cst_10 : f32 to vector<8x128xf32>
      %c0_11 = arith.constant 0 : index
      %c0_12 = arith.constant 0 : index
      %13 = vector.load %arg7[%c0_11, %c0_12] : memref<8x128xf32, #tpu.memory_space<vmem>>, vector<8x128xf32>
      tpu.vector_store %arg7[%c0_11, %c0_12], %12 {strides = array<i32>} : memref<8x128xf32, #tpu.memory_space<vmem>>, vector<8x128xf32>,
    } else {
    }
    %c0 = arith.constant 0 : index
    %c0_1 = arith.constant 0 : index
    %3 = vector.load %arg7[%c0, %c0_1] : memref<8x128xf32, #tpu.memory_space<vmem>>, vector<8x128xf32>
    %c0_2 = arith.constant 0 : index
    %c0_3 = arith.constant 0 : index
    %4 = vector.load %arg3[%c0_2, %c0_3] : memref<8x256xbf16, #tpu.memory_space<vmem>>, vector<8x256xbf16>
    %c0_4 = arith.constant 0 : index
    %c0_5 = arith.constant 0 : index
    %5 = vector.load %arg4[%c0_4, %c0_5] : memref<256x128xbf16, #tpu.memory_space<vmem>>, vector<256x128xbf16>
    %cst = arith.constant dense<0.000000e+00> : vector<8x128xf32>
    %6 = tpu.matmul %4, %5, %cst {dimension_numbers = #tpu.dot_dimension_numbers<[1], [0], [0], [1], [0, 0, 1, 1], [], []>} : vector<8x256xbf16>, vector<256x128xbf16>, vector<8x128xf32> -> vector<8x128xf32>
    %7 = arith.addf %3, %6 : vector<8x128xf32>
    %c0_6 = arith.constant 0 : index
    %c0_7 = arith.constant 0 : index
    %8 = vector.load %arg7[%c0_6, %c0_7] : memref<8x128xf32, #tpu.memory_space<vmem>>, vector<8x128xf32>
    tpu.vector_store %arg7[%c0_6, %c0_7], %7 {strides = array<i32>} : memref<8x128xf32, #tpu.memory_space<vmem>>, vector<8x128xf32>,
    %c0_i32_8 = arith.constant 0 : i32
    %9 = arith.cmpi eq, %arg2, %c0_i32_8 : i32
    %10 = arith.extui %9 : i1 to i32
    %c0_i32_9 = arith.constant 0 : i32
    %11 = arith.cmpi ne, %10, %c0_i32_9 : i32
    scf.if %11 {
      %c0_10 = arith.constant 0 : index
      %c0_11 = arith.constant 0 : index
      %12 = vector.load %arg7[%c0_10, %c0_11] : memref<8x128xf32, #tpu.memory_space<vmem>>, vector<8x128xf32>
      %c0_12 = arith.constant 0 : index
      %c0_13 = arith.constant 0 : index
      %13 = vector.load %arg5[%c0_12, %c0_13] : memref<1x128xf32, #tpu.memory_space<vmem>>, vector<1x128xf32>
      %14 = vector.broadcast %13 : vector<1x128xf32> to vector<8x128xf32>
      %15 = arith.addf %12, %14 : vector<8x128xf32>
      %16 = arith.truncf %15 : vector<8x128xf32> to vector<8x128xbf16>
      %c0_14 = arith.constant 0 : index
      %c0_15 = arith.constant 0 : index
      %17 = vector.load %arg6[%c0_14, %c0_15] : memref<8x128xbf16, #tpu.memory_space<vmem>>, vector<8x128xbf16>
      tpu.vector_store %arg6[%c0_14, %c0_15], %16 {strides = array<i32>} : memref<8x128xbf16, #tpu.memory_space<vmem>>, vector<8x128xbf16>,
    } else {
    }
    return
  }
  func.func @transform_0(%arg0: i32, %arg1: i32, %arg2: i32) -> (i32, i32) {
    %c0_i32 = arith.constant 0 : i32
    return %arg0, %arg2 : i32, i32
  }
  func.func @transform_1(%arg0: i32, %arg1: i32, %arg2: i32) -> (i32, i32) {
    %c0_i32 = arith.constant 0 : i32
    return %arg2, %arg1 : i32, i32
  }
  func.func @transform_2(%arg0: i32, %arg1: i32, %arg2: i32) -> (i32, i32) {
    %c0_i32 = arith.constant 0 : i32
    %c0_i32_0 = arith.constant 0 : i32
    return %c0_i32, %arg1 : i32, i32
  }
  func.func @transform_3(%arg0: i32, %arg1: i32, %arg2: i32) -> (i32, i32) {
    %c0_i32 = arith.constant 0 : i32
    return %arg0, %arg1 : i32, i32
  }
}

module attributes {stable_mosaic.version = 11 : i64} {
  func.func @_lmhead_loss_kernel(%arg0: i32, %arg1: memref<40x128xbf16, #tpu.memory_space<vmem>>, %arg2: memref<128x512xbf16, #tpu.memory_space<vmem>>, %arg3: memref<1x512xf32, #tpu.memory_space<vmem>>, %arg4: memref<40x1xi32, #tpu.memory_space<vmem>>, %arg5: memref<40x1xi32, #tpu.memory_space<vmem>>, %arg6: memref<4xf32, #tpu.memory_space<smem>>) attributes {dimension_semantics = [#tpu.dimension_semantics<arbitrary>], iteration_bounds = array<i64: 1>, scalar_prefetch = 0 : i64, scratch_operands = 0 : i64, tpu.core_type = #tpu.core_type<tc>, window_params = [{transform_indices = @transform_0, window_bounds = array<i64: 40, 128>}, {pipeline_mode = #tpu.pipeline_mode<synchronous>, transform_indices = @transform_1, window_bounds = array<i64: 128, 512>}, {pipeline_mode = #tpu.pipeline_mode<synchronous>, transform_indices = @transform_2, window_bounds = array<i64: 1, 512>}, {transform_indices = @transform_3, window_bounds = array<i64: 40, 1>}, {transform_indices = @transform_4, window_bounds = array<i64: 40, 1>}, {transform_indices = @transform_5, window_bounds = array<i64: 4>}]} {
    %c0_i32 = arith.constant 0 : i32
    %0 = arith.cmpi eq, %arg0, %c0_i32 : i32
    %1 = arith.extui %0 : i1 to i32
    %c0_i32_0 = arith.constant 0 : i32
    %2 = arith.cmpi ne, %1, %c0_i32_0 : i32
    scf.if %2 {
      %cst_26 = arith.constant 0.000000e+00 : f32
      %c0_27 = arith.constant 0 : index
      %76 = memref.load %arg6[%c0_27] : memref<4xf32, #tpu.memory_space<smem>>
      memref.store %cst_26, %arg6[%c0_27] : memref<4xf32, #tpu.memory_space<smem>>
      %cst_28 = arith.constant 0.000000e+00 : f32
      %c1_29 = arith.constant 1 : index
      %77 = memref.load %arg6[%c1_29] : memref<4xf32, #tpu.memory_space<smem>>
      memref.store %cst_28, %arg6[%c1_29] : memref<4xf32, #tpu.memory_space<smem>>
      %cst_30 = arith.constant 0.000000e+00 : f32
      %c2_31 = arith.constant 2 : index
      %78 = memref.load %arg6[%c2_31] : memref<4xf32, #tpu.memory_space<smem>>
      memref.store %cst_30, %arg6[%c2_31] : memref<4xf32, #tpu.memory_space<smem>>
      %cst_32 = arith.constant 0.000000e+00 : f32
      %c3_33 = arith.constant 3 : index
      %79 = memref.load %arg6[%c3_33] : memref<4xf32, #tpu.memory_space<smem>>
      memref.store %cst_32, %arg6[%c3_33] : memref<4xf32, #tpu.memory_space<smem>>
    } else {
    }
    %c0 = arith.constant 0 : index
    %c0_1 = arith.constant 0 : index
    %3 = vector.load %arg1[%c0, %c0_1] : memref<40x128xbf16, #tpu.memory_space<vmem>>, vector<40x128xbf16>
    %c0_2 = arith.constant 0 : index
    %c0_3 = arith.constant 0 : index
    %4 = vector.load %arg2[%c0_2, %c0_3] : memref<128x512xbf16, #tpu.memory_space<vmem>>, vector<128x512xbf16>
    %cst = arith.constant dense<0.000000e+00> : vector<40x512xf32>
    %5 = tpu.matmul %3, %4, %cst {dimension_numbers = #tpu.dot_dimension_numbers<[1], [0], [0], [1], [0, 0, 1, 1], [], []>} : vector<40x128xbf16>, vector<128x512xbf16>, vector<40x512xf32> -> vector<40x512xf32>
    %c0_4 = arith.constant 0 : index
    %c0_5 = arith.constant 0 : index
    %6 = vector.load %arg3[%c0_4, %c0_5] : memref<1x512xf32, #tpu.memory_space<vmem>>, vector<1x512xf32>
    %7 = vector.broadcast %6 : vector<1x512xf32> to vector<40x512xf32>
    %8 = arith.addf %5, %7 : vector<40x512xf32>
    %c0_6 = arith.constant 0 : index
    %c0_7 = arith.constant 0 : index
    %9 = vector.load %arg4[%c0_6, %c0_7] : memref<40x1xi32, #tpu.memory_space<vmem>>, vector<40x1xi32>
    %c0_8 = arith.constant 0 : index
    %c0_9 = arith.constant 0 : index
    %10 = vector.load %arg5[%c0_8, %c0_9] : memref<40x1xi32, #tpu.memory_space<vmem>>, vector<40x1xi32>
    %11 = tpu.iota {dimensions = array<i32: 1>} : vector<40x512xi32>
    %cst_10 = arith.constant dense<0xFF800000> : vector<40xf32>
    %12 = vector.multi_reduction <maximumf>, %8, %cst_10 [1] : vector<40x512xf32> to vector<40xf32>
    %13 = vector.shape_cast %12 : vector<40xf32> to vector<40x1xf32>
    %14 = vector.broadcast %13 : vector<40x1xf32> to vector<40x512xf32>
    %15 = arith.cmpf oge, %8, %14 : vector<40x512xf32>
    %c512_i32 = arith.constant 512 : i32
    %16 = vector.broadcast %c512_i32 : i32 to vector<40x512xi32>
    %17 = arith.select %15, %11, %16 : vector<40x512xi1>, vector<40x512xi32>
    %cst_11 = arith.constant dense<2147483647> : vector<40xi32>
    %18 = vector.multi_reduction <minsi>, %17, %cst_11 [1] : vector<40x512xi32> to vector<40xi32>
    %19 = vector.shape_cast %18 : vector<40xi32> to vector<40x1xi32>
    %20 = vector.broadcast %13 : vector<40x1xf32> to vector<40x512xf32>
    %21 = arith.subf %8, %20 : vector<40x512xf32>
    %22 = math.exp %21 : vector<40x512xf32>
    %cst_12 = arith.constant dense<0.000000e+00> : vector<40xf32>
    %23 = vector.multi_reduction <add>, %22, %cst_12 [1] : vector<40x512xf32> to vector<40xf32>
    %24 = vector.shape_cast %23 : vector<40xf32> to vector<40x1xf32>
    %25 = math.log %24 : vector<40x1xf32>
    %26 = arith.addf %13, %25 : vector<40x1xf32>
    %27 = vector.broadcast %9 : vector<40x1xi32> to vector<40x512xi32>
    %28 = arith.cmpi eq, %11, %27 : vector<40x512xi32>
    %cst_13 = arith.constant 0.000000e+00 : f32
    %29 = vector.broadcast %cst_13 : f32 to vector<40x512xf32>
    %30 = arith.select %28, %8, %29 : vector<40x512xi1>, vector<40x512xf32>
    %cst_14 = arith.constant dense<0.000000e+00> : vector<40xf32>
    %31 = vector.multi_reduction <add>, %30, %cst_14 [1] : vector<40x512xf32> to vector<40xf32>
    %32 = vector.shape_cast %31 : vector<40xf32> to vector<40x1xf32>
    %33 = arith.subf %26, %32 : vector<40x1xf32>
    %c-100_i32 = arith.constant -100 : i32
    %34 = vector.broadcast %c-100_i32 : i32 to vector<40x1xi32>
    %35 = arith.cmpi ne, %9, %34 : vector<40x1xi32>
    %c-100_i32_15 = arith.constant -100 : i32
    %36 = vector.broadcast %c-100_i32_15 : i32 to vector<40x1xi32>
    %37 = arith.cmpi ne, %10, %36 : vector<40x1xi32>
    %38 = arith.cmpi eq, %19, %10 : vector<40x1xi32>
    %39 = arith.andi %38, %37 : vector<40x1xi1>
    %c0_16 = arith.constant 0 : index
    %40 = memref.load %arg6[%c0_16] : memref<4xf32, #tpu.memory_space<smem>>
    %cst_17 = arith.constant 0.000000e+00 : f32
    %41 = vector.broadcast %cst_17 : f32 to vector<40x1xf32>
    %42 = arith.select %35, %33, %41 : vector<40x1xi1>, vector<40x1xf32>
    %43 = vector.shape_cast %42 : vector<40x1xf32> to vector<1x40x1xf32>
    %cst_18 = arith.constant dense<0.000000e+00> : vector<1xf32>
    %44 = vector.multi_reduction <add>, %43, %cst_18 [1, 2] : vector<1x40x1xf32> to vector<1xf32>
    %45 = vector.shape_cast %44 : vector<1xf32> to vector<1x1x1xf32>
    %46 = vector.extract %45[0, 0, 0] : f32 from vector<1x1x1xf32>
    %47 = arith.addf %40, %46 : f32
    %c0_19 = arith.constant 0 : index
    %48 = memref.load %arg6[%c0_19] : memref<4xf32, #tpu.memory_space<smem>>
    memref.store %47, %arg6[%c0_19] : memref<4xf32, #tpu.memory_space<smem>>
    %c1 = arith.constant 1 : index
    %49 = memref.load %arg6[%c1] : memref<4xf32, #tpu.memory_space<smem>>
    %50 = arith.extui %35 : vector<40x1xi1> to vector<40x1xi32>
    %51 = arith.sitofp %50 : vector<40x1xi32> to vector<40x1xf32>
    %52 = vector.shape_cast %51 : vector<40x1xf32> to vector<1x40x1xf32>
    %cst_20 = arith.constant dense<0.000000e+00> : vector<1xf32>
    %53 = vector.multi_reduction <add>, %52, %cst_20 [1, 2] : vector<1x40x1xf32> to vector<1xf32>
    %54 = vector.shape_cast %53 : vector<1xf32> to vector<1x1x1xf32>
    %55 = vector.extract %54[0, 0, 0] : f32 from vector<1x1x1xf32>
    %56 = arith.addf %49, %55 : f32
    %c1_21 = arith.constant 1 : index
    %57 = memref.load %arg6[%c1_21] : memref<4xf32, #tpu.memory_space<smem>>
    memref.store %56, %arg6[%c1_21] : memref<4xf32, #tpu.memory_space<smem>>
    %c2 = arith.constant 2 : index
    %58 = memref.load %arg6[%c2] : memref<4xf32, #tpu.memory_space<smem>>
    %59 = arith.extui %39 : vector<40x1xi1> to vector<40x1xi32>
    %60 = arith.sitofp %59 : vector<40x1xi32> to vector<40x1xf32>
    %61 = vector.shape_cast %60 : vector<40x1xf32> to vector<1x40x1xf32>
    %cst_22 = arith.constant dense<0.000000e+00> : vector<1xf32>
    %62 = vector.multi_reduction <add>, %61, %cst_22 [1, 2] : vector<1x40x1xf32> to vector<1xf32>
    %63 = vector.shape_cast %62 : vector<1xf32> to vector<1x1x1xf32>
    %64 = vector.extract %63[0, 0, 0] : f32 from vector<1x1x1xf32>
    %65 = arith.addf %58, %64 : f32
    %c2_23 = arith.constant 2 : index
    %66 = memref.load %arg6[%c2_23] : memref<4xf32, #tpu.memory_space<smem>>
    memref.store %65, %arg6[%c2_23] : memref<4xf32, #tpu.memory_space<smem>>
    %c3 = arith.constant 3 : index
    %67 = memref.load %arg6[%c3] : memref<4xf32, #tpu.memory_space<smem>>
    %68 = arith.extui %37 : vector<40x1xi1> to vector<40x1xi32>
    %69 = arith.sitofp %68 : vector<40x1xi32> to vector<40x1xf32>
    %70 = vector.shape_cast %69 : vector<40x1xf32> to vector<1x40x1xf32>
    %cst_24 = arith.constant dense<0.000000e+00> : vector<1xf32>
    %71 = vector.multi_reduction <add>, %70, %cst_24 [1, 2] : vector<1x40x1xf32> to vector<1xf32>
    %72 = vector.shape_cast %71 : vector<1xf32> to vector<1x1x1xf32>
    %73 = vector.extract %72[0, 0, 0] : f32 from vector<1x1x1xf32>
    %74 = arith.addf %67, %73 : f32
    %c3_25 = arith.constant 3 : index
    %75 = memref.load %arg6[%c3_25] : memref<4xf32, #tpu.memory_space<smem>>
    memref.store %74, %arg6[%c3_25] : memref<4xf32, #tpu.memory_space<smem>>
    return
  }
  func.func @transform_0(%arg0: i32) -> (i32, i32) {
    %c0_i32 = arith.constant 0 : i32
    %c0_i32_0 = arith.constant 0 : i32
    return %arg0, %c0_i32 : i32, i32
  }
  func.func @transform_1(%arg0: i32) -> (i32, i32) {
    %c0_i32 = arith.constant 0 : i32
    %c0_i32_0 = arith.constant 0 : i32
    %c0_i32_1 = arith.constant 0 : i32
    return %c0_i32, %c0_i32_0 : i32, i32
  }
  func.func @transform_2(%arg0: i32) -> (i32, i32) {
    %c0_i32 = arith.constant 0 : i32
    %c0_i32_0 = arith.constant 0 : i32
    %c0_i32_1 = arith.constant 0 : i32
    return %c0_i32, %c0_i32_0 : i32, i32
  }
  func.func @transform_3(%arg0: i32) -> (i32, i32) {
    %c0_i32 = arith.constant 0 : i32
    %c0_i32_0 = arith.constant 0 : i32
    return %arg0, %c0_i32 : i32, i32
  }
  func.func @transform_4(%arg0: i32) -> (i32, i32) {
    %c0_i32 = arith.constant 0 : i32
    %c0_i32_0 = arith.constant 0 : i32
    return %arg0, %c0_i32 : i32, i32
  }
  func.func @transform_5(%arg0: i32) -> i32 {
    %c0_i32 = arith.constant 0 : i32
    %c0_i32_0 = arith.constant 0 : i32
    return %c0_i32 : i32
  }
}

</mosaic_0001>

<llo_original>
// kernel: merg_forward.2
$region0: #{merg_forward.2}
  #allocation0 [shape = 'u32[]', space=smem, size = 0x4, offset = 0x4, fixed_abs, tag = 'smem constant byte address 0x4 - core index']
  #allocation1 [shape = 'u32[144,128]{1,0:T(1,128)}', space=vmem, size = 0x12000, scoped, tag = 'internal scratch']
  #allocation2 [shape = 'f32[8,128]{1,0:T(8,128)}', space=vmem, size = 0x1000, scoped, tag = 'scratch operand']
  %s0 = inlined_call_operand.vmem [shape: bf16[8,256], index: 0, kind: input, shape index: {}]
  %s1 = inlined_call_operand.hbm [shape: bf16[256,128], index: 1, kind: input, shape index: {}]
  %s2 = inlined_call_operand.vmem [shape: f32[1,128], index: 2, kind: input, shape index: {}]
  %s3 = inlined_call_operand.vmem [shape: bf16[8,128], index: 3, kind: output, shape index: {}]
  %s4 = sld [smem:[#allocation0]]
  $region34: #{merg_forward.2} parent=0
    _
  %s6 = ssub.s32 1, %s4
  %s7 = scalar_select 0, %s6, %s4
  $region1: #{merg_forward.2} parent=0
    #allocation3 [shape = 'u8[65536]{0}', space=vmem, size = 0x10000, scoped, tag = 'input window, operand 1, single buffered']
    #allocation4 [shape = 's32[1]{0}', space=sflag, size = 0x4, scoped, tag = 'scoped memory for merg_forward.2']
    %8 = vsyncpa [#allocation4], 0
    // Predicated region
    $region2: #{merg_forward.2} parent=1 // pred_check
      _
    $region3: #{merg_forward.2} parent=1 // pred_check_branch
      %10 = sbr.rel (0) target = $region5
    $region4: #{merg_forward.2} parent=1 // pred_region
      _
    $region5: #{merg_forward.2} parent=1 // pred_fallthru
      _
    // Predicated region
    $region6: #{merg_forward.2} parent=1 // pred_check
      _
    $region7: #{merg_forward.2} parent=1 // pred_check_branch
      %12 = sbr.rel (0) target = $region9
    $region8: #{merg_forward.2} parent=1 // pred_region
      %s14 = ssub.s32 2048, 2048
      %15 = vsyncadd [#allocation4], %s14
      %s16 = sshll.u32 [#allocation3], 4
      %s17 = int_to_ptr.vmem [resolvable:$true] %s16
      %22 = dma.hbm_to_vmem [thread:$0]  %s1, 2048, %s17, [#allocation4], 64, 64, 4
    $region9: #{merg_forward.2} parent=1 // pred_fallthru
      _
    // Predicated region
    $region10: #{merg_forward.2} parent=1 // pred_check
      _
    $region11: #{merg_forward.2} parent=1 // pred_check_branch
      %24 = sbr.rel (0) target = $region13
    $region12: #{merg_forward.2} parent=1 // pred_region
      _
    $region13: #{merg_forward.2} parent=1 // pred_fallthru
      _
    // Predicated region
    $region14: #{merg_forward.2} parent=1 // pred_check
      _
    $region15: #{merg_forward.2} parent=1 // pred_check_branch
      %26 = sbr.rel (0) target = $region17
    $region16: #{merg_forward.2} parent=1 // pred_region
      %27 = dma.done [#allocation4], 2048
    $region17: #{merg_forward.2} parent=1 // pred_fallthru
      _
    %p29 = scmp.eq.s32.totalorder 0, 0
    // Predicated region
    $region18: #{merg_forward.2} parent=1 // pred_check
      %p30 = pneg %p29
    $region19: #{merg_forward.2} parent=1 // pred_check_branch
      %32 = sbr.rel (%p30) target = $region21
    $region20: #{merg_forward.2} parent=1 // pred_region
      %33 = vst [vmem:[#allocation2] sm:$0xff] 0.0
    $region21: #{merg_forward.2} parent=1 // pred_fallthru
      _
    %v34 = vld [vmem:[#allocation2] sm:$0xff]
    %v35 = vld [vmem:[%s0] sm:$0xff]
    %v36 = vld [vmem:[#allocation3] sm:$0xf]
    %v37 = vld [vmem:[#allocation3 + $0x4] sm:$0xf]
    %v38 = vld [vmem:[#allocation3 + $0x8] sm:$0xf]
    %v39 = vld [vmem:[#allocation3 + $0xc] sm:$0xf]
    %v40 = vld [vmem:[#allocation3 + $0x10] sm:$0xf]
    %v41 = vld [vmem:[#allocation3 + $0x14] sm:$0xf]
    %v42 = vld [vmem:[#allocation3 + $0x18] sm:$0xf]
    %v43 = vld [vmem:[#allocation3 + $0x1c] sm:$0xf]
    %v44 = vld [vmem:[#allocation3 + $0x20] sm:$0xf]
    %v45 = vld [vmem:[#allocation3 + $0x24] sm:$0xf]
    %v46 = vld [vmem:[#allocation3 + $0x28] sm:$0xf]
    %v47 = vld [vmem:[#allocation3 + $0x2c] sm:$0xf]
    %v48 = vld [vmem:[#allocation3 + $0x30] sm:$0xf]
    %v49 = vld [vmem:[#allocation3 + $0x34] sm:$0xf]
    %v50 = vld [vmem:[#allocation3 + $0x38] sm:$0xf]
    %v51 = vld [vmem:[#allocation3 + $0x3c] sm:$0xf]
    %v52 = vld [vmem:[#allocation3 + $0x40] sm:$0xf]
    %v53 = vld [vmem:[#allocation3 + $0x44] sm:$0xf]
    %v54 = vld [vmem:[#allocation3 + $0x48] sm:$0xf]
    %v55 = vld [vmem:[#allocation3 + $0x4c] sm:$0xf]
    %v56 = vld [vmem:[#allocation3 + $0x50] sm:$0xf]
    %v57 = vld [vmem:[#allocation3 + $0x54] sm:$0xf]
    %v58 = vld [vmem:[#allocation3 + $0x58] sm:$0xf]
    %v59 = vld [vmem:[#allocation3 + $0x5c] sm:$0xf]
    %v60 = vld [vmem:[#allocation3 + $0x60] sm:$0xf]
    %v61 = vld [vmem:[#allocation3 + $0x64] sm:$0xf]
    %v62 = vld [vmem:[#allocation3 + $0x68] sm:$0xf]
    %v63 = vld [vmem:[#allocation3 + $0x6c] sm:$0xf]
    %v64 = vld [vmem:[#allocation3 + $0x70] sm:$0xf]
    %v65 = vld [vmem:[#allocation3 + $0x74] sm:$0xf]
    %v66 = vld [vmem:[#allocation3 + $0x78] sm:$0xf]
    %v67 = vld [vmem:[#allocation3 + $0x7c] sm:$0xf]
    %v69 = vunpack.c.l.b16 %v35
    %v70 = vunpack.c.h.b16 %v35
    %v71 = vpack.c.b16 %v69, %v69
    %v72 = vpack.c.b16 %v70, %v70
    %v107 = vunpack.c.l.b16 %v36
    %v108 = vunpack.c.l.b16 %v37
    %v109 = vunpack.c.l.b16 %v38
    %v110 = vunpack.c.l.b16 %v39
    %v111 = vunpack.c.l.b16 %v40
    %v112 = vunpack.c.l.b16 %v41
    %v113 = vunpack.c.l.b16 %v42
    %v114 = vunpack.c.l.b16 %v43
    %v115 = vunpack.c.l.b16 %v44
    %v116 = vunpack.c.l.b16 %v45
    %v117 = vunpack.c.l.b16 %v46
    %v118 = vunpack.c.l.b16 %v47
    %v119 = vunpack.c.l.b16 %v48
    %v120 = vunpack.c.l.b16 %v49
    %v121 = vunpack.c.l.b16 %v50
    %v122 = vunpack.c.l.b16 %v51
    %v123 = vunpack.c.l.b16 %v52
    %v124 = vunpack.c.l.b16 %v53
    %v125 = vunpack.c.l.b16 %v54
    %v126 = vunpack.c.l.b16 %v55
    %v127 = vunpack.c.l.b16 %v56
    %v128 = vunpack.c.l.b16 %v57
    %v129 = vunpack.c.l.b16 %v58
    %v130 = vunpack.c.l.b16 %v59
    %v131 = vunpack.c.l.b16 %v60
    %v132 = vunpack.c.l.b16 %v61
    %v133 = vunpack.c.l.b16 %v62
    %v134 = vunpack.c.l.b16 %v63
    %v135 = vunpack.c.l.b16 %v64
    %v136 = vunpack.c.l.b16 %v65
    %v137 = vunpack.c.l.b16 %v66
    %v138 = vunpack.c.l.b16 %v67
    %v139 = vpack.c.b16 %v108, %v107
    %v140 = vpack.c.b16 %v110, %v109
    %v141 = vpack.c.b16 %v112, %v111
    %v142 = vpack.c.b16 %v114, %v113
    %v143 = vpack.c.b16 %v116, %v115
    %v144 = vpack.c.b16 %v118, %v117
    %v145 = vpack.c.b16 %v120, %v119
    %v146 = vpack.c.b16 %v122, %v121
    %v147 = vpack.c.b16 %v124, %v123
    %v148 = vpack.c.b16 %v126, %v125
    %v149 = vpack.c.b16 %v128, %v127
    %v150 = vpack.c.b16 %v130, %v129
    %v151 = vpack.c.b16 %v132, %v131
    %v152 = vpack.c.b16 %v134, %v133
    %v153 = vpack.c.b16 %v136, %v135
    %v154 = vpack.c.b16 %v138, %v137
    %171 = vmatprep.subr.bf16.mxu0 0
    %172 = vmatpush1.bf16.msra.mxu0 %v139
    %173 = vmatprep.subr.bf16.mxu0 0
    %174 = vmatpush1.bf16.msra.mxu0 %v140
    %175 = vmatprep.subr.bf16.mxu0 0
    %176 = vmatpush1.bf16.msra.mxu0 %v141
    %177 = vmatprep.subr.bf16.mxu0 0
    %178 = vmatpush1.bf16.msra.mxu0 %v142
    %179 = vmatprep.subr.bf16.mxu0 0
    %180 = vmatpush1.bf16.msra.mxu0 %v143
    %181 = vmatprep.subr.bf16.mxu0 0
    %182 = vmatpush1.bf16.msra.mxu0 %v144
    %183 = vmatprep.subr.bf16.mxu0 0
    %184 = vmatpush1.bf16.msra.mxu0 %v145
    %185 = vmatprep.subr.bf16.mxu0 0
    %186 = vmatpush1.bf16.msra.mxu0 %v146
    %187 = vmatprep.subr.bf16.mxu0 0
    %188 = vmatpush1.bf16.msra.mxu0 %v147
    %189 = vmatprep.subr.bf16.mxu0 0
    %190 = vmatpush1.bf16.msra.mxu0 %v148
    %191 = vmatprep.subr.bf16.mxu0 0
    %192 = vmatpush1.bf16.msra.mxu0 %v149
    %193 = vmatprep.subr.bf16.mxu0 0
    %194 = vmatpush1.bf16.msra.mxu0 %v150
    %195 = vmatprep.subr.bf16.mxu0 0
    %196 = vmatpush1.bf16.msra.mxu0 %v151
    %197 = vmatprep.subr.bf16.mxu0 0
    %198 = vmatpush1.bf16.msra.mxu0 %v152
    %199 = vmatprep.subr.bf16.mxu0 0
    %200 = vmatpush1.bf16.msra.mxu0 %v153
    %201 = vmatprep.subr.bf16.mxu0 0
    %202 = vmatpush1.bf16.msra.mxu0 %v154
    %203 = vmatprep.mubr.bf16.mxu0 %v72
    %204 = vmatmul.mubr.bf16.gmra.mrb[0].mxu0 %v71
    %v205 = vpop.f32.mrb[0].mxu0
    %v206 = vadd.f32 0.0, %v205
    %v207 = vpop.f32.mrb[0].mxu0
    %v208 = vpop.f32.mrb[0].mxu0
    %v209 = vpop.f32.mrb[0].mxu0
    %210 = vdwg.mxu0
    %v211 = vadd.f32 %v34, %v206
    %212 = vst [vmem:[#allocation2] sm:$0xff] %v211
    // Predicated region
    $region22: #{merg_forward.2} parent=1 // pred_check
      %p213 = pneg %p29
    $region23: #{merg_forward.2} parent=1 // pred_check_branch
      %215 = sbr.rel (%p213) target = $region25
    $region24: #{merg_forward.2} parent=1 // pred_region
      %v216 = vld [vmem:[#allocation2] sm:$0xff]
      %v217 = vld [vmem:[%s2] sm:$0x1]
      %v219 = vlaneseq
      %v220 = vshrl.u32 %v219, 7
      %v221 = vsub.s32 0, %v220
      %v222 = vrot.slane %v217, %v221
      %v224 = vadd.f32 %v216, %v222
      %v225 = vpack.c.bf16 %v224, %v224
      %226 = vst [vmem:[%s3] sm:$0xf] %v225
    $region25: #{merg_forward.2} parent=1 // pred_fallthru
      _
    // Predicated region
    $region26: #{merg_forward.2} parent=1 // pred_check
      _
    $region27: #{merg_forward.2} parent=1 // pred_check_branch
      %228 = sbr.rel (0) target = $region29
    $region28: #{merg_forward.2} parent=1 // pred_region
      _
    $region29: #{merg_forward.2} parent=1 // pred_fallthru
      _
    // Predicated region
    $region30: #{merg_forward.2} parent=1 // pred_check
      _
    $region31: #{merg_forward.2} parent=1 // pred_check_branch
      %230 = sbr.rel (0) target = $region33
    $region32: #{merg_forward.2} parent=1 // pred_region
      _
    $region33: #{merg_forward.2} parent=1 // pred_fallthru
      _
    %231 = vsyncpa [#allocation4], 1

// kernel: merg_forward.3
$region0: #{merg_forward.3}
  #allocation0 [shape = 'u32[]', space=smem, size = 0x4, offset = 0x4, fixed_abs, tag = 'smem constant byte address 0x4 - core index']
  #allocation1 [shape = 'u32[144,128]{1,0:T(1,128)}', space=vmem, size = 0x12000, scoped, tag = 'internal scratch']
  %s0 = inlined_call_operand.vmem [shape: bf16[40,128], index: 0, kind: input, shape index: {}]
  %s1 = inlined_call_operand.vmem [shape: bf16[128,512], index: 1, kind: input, shape index: {}]
  %s2 = inlined_call_operand.vmem [shape: f32[1,512], index: 2, kind: input, shape index: {}]
  %s3 = inlined_call_operand.vmem [shape: s32[40,1], index: 3, kind: input, shape index: {}]
  %s4 = inlined_call_operand.vmem [shape: s32[40,1], index: 4, kind: input, shape index: {}]
  %s5 = inlined_call_operand.vmem [shape: f32[4], index: 5, kind: output, shape index: {}]
  %s6 = sld [smem:[#allocation0]]
  $region34: #{merg_forward.3} parent=0
    _
  %s8 = ssub.s32 1, %s6
  %s9 = scalar_select 0, %s8, %s6
  $region1: #{merg_forward.3} parent=0
    #allocation2 [shape = 'u8[512]{0}', space=smem, size = 0x200, scoped, tag = 'output window, operand 0, single buffered']
    #allocation3 [shape = 's32[1]{0}', space=sflag, size = 0x4, scoped, tag = 'scoped memory for merg_forward.3']
    %10 = vsyncpa [#allocation3], 0
    // Predicated region
    $region2: #{merg_forward.3} parent=1 // pred_check
      _
    $region3: #{merg_forward.3} parent=1 // pred_check_branch
      %12 = sbr.rel (0) target = $region5
    $region4: #{merg_forward.3} parent=1 // pred_region
      _
    $region5: #{merg_forward.3} parent=1 // pred_fallthru
      _
    // Predicated region
    $region6: #{merg_forward.3} parent=1 // pred_check
      _
    $region7: #{merg_forward.3} parent=1 // pred_check_branch
      %14 = sbr.rel (0) target = $region9
    $region8: #{merg_forward.3} parent=1 // pred_region
      _
    $region9: #{merg_forward.3} parent=1 // pred_fallthru
      _
    // Predicated region
    $region10: #{merg_forward.3} parent=1 // pred_check
      _
    $region11: #{merg_forward.3} parent=1 // pred_check_branch
      %16 = sbr.rel (0) target = $region13
    $region12: #{merg_forward.3} parent=1 // pred_region
      _
    $region13: #{merg_forward.3} parent=1 // pred_fallthru
      _
    // Predicated region
    $region14: #{merg_forward.3} parent=1 // pred_check
      _
    $region15: #{merg_forward.3} parent=1 // pred_check_branch
      %18 = sbr.rel (0) target = $region17
    $region16: #{merg_forward.3} parent=1 // pred_region
      _
    $region17: #{merg_forward.3} parent=1 // pred_fallthru
      _
    // Predicated region
    $region18: #{merg_forward.3} parent=1 // pred_check
      _
    $region19: #{merg_forward.3} parent=1 // pred_check_branch
      %20 = sbr.rel (0) target = $region21
    $region20: #{merg_forward.3} parent=1 // pred_region
      _
    $region21: #{merg_forward.3} parent=1 // pred_fallthru
      _
    %p22 = scmp.eq.s32.totalorder 0, 0
    // Predicated region
    $region22: #{merg_forward.3} parent=1 // pred_check
      %p23 = pneg %p22
    $region23: #{merg_forward.3} parent=1 // pred_check_branch
      %25 = sbr.rel (%p23) target = $region25
    $region24: #{merg_forward.3} parent=1 // pred_region
      %s26 = scalar_lea.smem [#allocation2], 0
      %27 = sst [smem:[%s26]] 0.0
      %s28 = scalar_lea.smem [#allocation2], 1
      %29 = sst [smem:[%s28]] 0.0
      %s30 = scalar_lea.smem [#allocation2], 2
      %31 = sst [smem:[%s30]] 0.0
      %s32 = scalar_lea.smem [#allocation2], 3
      %33 = sst [smem:[%s32]] 0.0
    $region25: #{merg_forward.3} parent=1 // pred_fallthru
      _
    %v34 = vld [vmem:[%s0] sm:$0xf]
    %v35 = vld [vmem:[%s0 + $0x4] sm:$0xf]
    %v36 = vld [vmem:[%s0 + $0x8] sm:$0xf]
    %v37 = vld [vmem:[%s0 + $0xc] sm:$0xf]
    %v38 = vld [vmem:[%s0 + $0x10] sm:$0xf]
    %v39 = vld [vmem:[%s1] sm:$0xff]
    %v40 = vld [vmem:[%s1 + $0x8] sm:$0xff]
    %v41 = vld [vmem:[%s1 + $0x10] sm:$0xff]
    %v42 = vld [vmem:[%s1 + $0x18] sm:$0xff]
    %v43 = vld [vmem:[%s1 + $0x20] sm:$0xff]
    %v44 = vld [vmem:[%s1 + $0x28] sm:$0xff]
    %v45 = vld [vmem:[%s1 + $0x30] sm:$0xff]
    %v46 = vld [vmem:[%s1 + $0x38] sm:$0xff]
    %v47 = vld [vmem:[%s1 + $0x40] sm:$0xff]
    %v48 = vld [vmem:[%s1 + $0x48] sm:$0xff]
    %v49 = vld [vmem:[%s1 + $0x50] sm:$0xff]
    %v50 = vld [vmem:[%s1 + $0x58] sm:$0xff]
    %v51 = vld [vmem:[%s1 + $0x60] sm:$0xff]
    %v52 = vld [vmem:[%s1 + $0x68] sm:$0xff]
    %v53 = vld [vmem:[%s1 + $0x70] sm:$0xff]
    %v54 = vld [vmem:[%s1 + $0x78] sm:$0xff]
    %v55 = vld [vmem:[%s1 + $0x80] sm:$0xff]
    %v56 = vld [vmem:[%s1 + $0x88] sm:$0xff]
    %v57 = vld [vmem:[%s1 + $0x90] sm:$0xff]
    %v58 = vld [vmem:[%s1 + $0x98] sm:$0xff]
    %v59 = vld [vmem:[%s1 + $0xa0] sm:$0xff]
    %v60 = vld [vmem:[%s1 + $0xa8] sm:$0xff]
    %v61 = vld [vmem:[%s1 + $0xb0] sm:$0xff]
    %v62 = vld [vmem:[%s1 + $0xb8] sm:$0xff]
    %v63 = vld [vmem:[%s1 + $0xc0] sm:$0xff]
    %v64 = vld [vmem:[%s1 + $0xc8] sm:$0xff]
    %v65 = vld [vmem:[%s1 + $0xd0] sm:$0xff]
    %v66 = vld [vmem:[%s1 + $0xd8] sm:$0xff]
    %v67 = vld [vmem:[%s1 + $0xe0] sm:$0xff]
    %v68 = vld [vmem:[%s1 + $0xe8] sm:$0xff]
    %v69 = vld [vmem:[%s1 + $0xf0] sm:$0xff]
    %v70 = vld [vmem:[%s1 + $0xf8] sm:$0xff]
    %v71 = vld [vmem:[%s2] sm:$0xf]
    %v73 = vlaneseq
    %v74 = vshrl.u32 %v73, 7
    %v75 = vsub.s32 0, %v74
    %v76 = vrot.slane %v71, %v75
    %v77 = vlaneseq
    %v78 = vshrl.u32 %v77, 7
    %v79 = vsub.s32 1, %v78
    %v80 = vrot.slane %v71, %v79
    %v81 = vlaneseq
    %v82 = vshrl.u32 %v81, 7
    %v83 = vsub.s32 2, %v82
    %v84 = vrot.slane %v71, %v83
    %v85 = vlaneseq
    %v86 = vshrl.u32 %v85, 7
    %v87 = vsub.s32 3, %v86
    %v88 = vrot.slane %v71, %v87
    %v98 = vunpack.c.l.b16 %v34
    %v99 = vunpack.c.l.b16 %v35
    %v100 = vunpack.c.l.b16 %v36
    %v101 = vunpack.c.l.b16 %v37
    %v102 = vunpack.c.l.b16 %v38
    %v103 = vpack.c.b16 %v99, %v98
    %v104 = vpack.c.b16 %v101, %v100
    %v105 = vpack.c.b16 %v102, %v102
    %v141 = vunpack.c.l.b16 %v39
    %v142 = vunpack.c.h.b16 %v39
    %v143 = vunpack.c.l.b16 %v40
    %v144 = vunpack.c.h.b16 %v40
    %v145 = vunpack.c.l.b16 %v41
    %v146 = vunpack.c.h.b16 %v41
    %v147 = vunpack.c.l.b16 %v42
    %v148 = vunpack.c.h.b16 %v42
    %v149 = vunpack.c.l.b16 %v43
    %v150 = vunpack.c.h.b16 %v43
    %v151 = vunpack.c.l.b16 %v44
    %v152 = vunpack.c.h.b16 %v44
    %v153 = vunpack.c.l.b16 %v45
    %v154 = vunpack.c.h.b16 %v45
    %v155 = vunpack.c.l.b16 %v46
    %v156 = vunpack.c.h.b16 %v46
    %v157 = vunpack.c.l.b16 %v47
    %v158 = vunpack.c.h.b16 %v47
    %v159 = vunpack.c.l.b16 %v48
    %v160 = vunpack.c.h.b16 %v48
    %v161 = vunpack.c.l.b16 %v49
    %v162 = vunpack.c.h.b16 %v49
    %v163 = vunpack.c.l.b16 %v50
    %v164 = vunpack.c.h.b16 %v50
    %v165 = vunpack.c.l.b16 %v51
    %v166 = vunpack.c.h.b16 %v51
    %v167 = vunpack.c.l.b16 %v52
    %v168 = vunpack.c.h.b16 %v52
    %v169 = vunpack.c.l.b16 %v53
    %v170 = vunpack.c.h.b16 %v53
    %v171 = vunpack.c.l.b16 %v54
    %v172 = vunpack.c.h.b16 %v54
    %v173 = vunpack.c.l.b16 %v55
    %v174 = vunpack.c.h.b16 %v55
    %v175 = vunpack.c.l.b16 %v56
    %v176 = vunpack.c.h.b16 %v56
    %v177 = vunpack.c.l.b16 %v57
    %v178 = vunpack.c.h.b16 %v57
    %v179 = vunpack.c.l.b16 %v58
    %v180 = vunpack.c.h.b16 %v58
    %v181 = vunpack.c.l.b16 %v59
    %v182 = vunpack.c.h.b16 %v59
    %v183 = vunpack.c.l.b16 %v60
    %v184 = vunpack.c.h.b16 %v60
    %v185 = vunpack.c.l.b16 %v61
    %v186 = vunpack.c.h.b16 %v61
    %v187 = vunpack.c.l.b16 %v62
    %v188 = vunpack.c.h.b16 %v62
    %v189 = vunpack.c.l.b16 %v63
    %v190 = vunpack.c.h.b16 %v63
    %v191 = vunpack.c.l.b16 %v64
    %v192 = vunpack.c.h.b16 %v64
    %v193 = vunpack.c.l.b16 %v65
    %v194 = vunpack.c.h.b16 %v65
    %v195 = vunpack.c.l.b16 %v66
    %v196 = vunpack.c.h.b16 %v66
    %v197 = vunpack.c.l.b16 %v67
    %v198 = vunpack.c.h.b16 %v67
    %v199 = vunpack.c.l.b16 %v68
    %v200 = vunpack.c.h.b16 %v68
    %v201 = vunpack.c.l.b16 %v69
    %v202 = vunpack.c.h.b16 %v69
    %v203 = vunpack.c.l.b16 %v70
    %v204 = vunpack.c.h.b16 %v70
    %v205 = vpack.c.b16 %v145, %v141
    %v206 = vpack.c.b16 %v146, %v142
    %v207 = vpack.c.b16 %v147, %v143
    %v208 = vpack.c.b16 %v148, %v144
    %v209 = vpack.c.b16 %v153, %v149
    %v210 = vpack.c.b16 %v154, %v150
    %v211 = vpack.c.b16 %v155, %v151
    %v212 = vpack.c.b16 %v156, %v152
    %v213 = vpack.c.b16 %v161, %v157
    %v214 = vpack.c.b16 %v162, %v158
    %v215 = vpack.c.b16 %v163, %v159
    %v216 = vpack.c.b16 %v164, %v160
    %v217 = vpack.c.b16 %v169, %v165
    %v218 = vpack.c.b16 %v170, %v166
    %v219 = vpack.c.b16 %v171, %v167
    %v220 = vpack.c.b16 %v172, %v168
    %v221 = vpack.c.b16 %v177, %v173
    %v222 = vpack.c.b16 %v178, %v174
    %v223 = vpack.c.b16 %v179, %v175
    %v224 = vpack.c.b16 %v180, %v176
    %v225 = vpack.c.b16 %v185, %v181
    %v226 = vpack.c.b16 %v186, %v182
    %v227 = vpack.c.b16 %v187, %v183
    %v228 = vpack.c.b16 %v188, %v184
    %v229 = vpack.c.b16 %v193, %v189
    %v230 = vpack.c.b16 %v194, %v190
    %v231 = vpack.c.b16 %v195, %v191
    %v232 = vpack.c.b16 %v196, %v192
    %v233 = vpack.c.b16 %v201, %v197
    %v234 = vpack.c.b16 %v202, %v198
    %v235 = vpack.c.b16 %v203, %v199
    %v236 = vpack.c.b16 %v204, %v200
    %269 = vmatprep.subr.bf16.mxu0 %v206
    %270 = vmatpush1.bf16.msra.mxu0 %v205
    %271 = vmatprep.subr.bf16.mxu0 %v210
    %272 = vmatpush1.bf16.msra.mxu0 %v209
    %273 = vmatprep.subr.bf16.mxu0 %v214
    %274 = vmatpush1.bf16.msra.mxu0 %v213
    %275 = vmatprep.subr.bf16.mxu0 %v218
    %276 = vmatpush1.bf16.msra.mxu0 %v217
    %277 = vmatprep.subr.bf16.mxu0 %v222
    %278 = vmatpush1.bf16.msra.mxu0 %v221
    %279 = vmatprep.subr.bf16.mxu0 %v226
    %280 = vmatpush1.bf16.msra.mxu0 %v225
    %281 = vmatprep.subr.bf16.mxu0 %v230
    %282 = vmatpush1.bf16.msra.mxu0 %v229
    %283 = vmatprep.subr.bf16.mxu0 %v234
    %284 = vmatpush1.bf16.msra.mxu0 %v233
    %285 = vmatprep.subr.bf16.mxu0 0
    %286 = vmatpush1.bf16.msra.mxu0 0
    %287 = vmatprep.subr.bf16.mxu0 0
    %288 = vmatpush1.bf16.msra.mxu0 0
    %289 = vmatprep.subr.bf16.mxu0 0
    %290 = vmatpush1.bf16.msra.mxu0 0
    %291 = vmatprep.subr.bf16.mxu0 0
    %292 = vmatpush1.bf16.msra.mxu0 0
    %293 = vmatprep.subr.bf16.mxu0 0
    %294 = vmatpush1.bf16.msra.mxu0 0
    %295 = vmatprep.subr.bf16.mxu0 0
    %296 = vmatpush1.bf16.msra.mxu0 0
    %297 = vmatprep.subr.bf16.mxu0 0
    %298 = vmatpush1.bf16.msra.mxu0 0
    %299 = vmatprep.subr.bf16.mxu0 0
    %300 = vmatpush1.bf16.msra.mxu0 0
    %301 = vmatprep.mubr.bf16.mxu0 0
    %302 = vmatmul.mubr.bf16.gmra.mrb[0].mxu0 %v103
    %v303 = vpop.f32.mrb[0].mxu0
    %v304 = vadd.f32 %v76, %v303
    %v305 = vpop.f32.mrb[0].mxu0
    %v306 = vadd.f32 %v80, %v305
    %v307 = vpop.f32.mrb[0].mxu0
    %v308 = vadd.f32 %v76, %v307
    %v309 = vpop.f32.mrb[0].mxu0
    %v310 = vadd.f32 %v80, %v309
    %311 = vmatprep.mubr.bf16.mxu0 0
    %312 = vmatmul.mubr.bf16.gmra.mrb[0].mxu0 %v104
    %v313 = vpop.f32.mrb[0].mxu0
    %v314 = vadd.f32 %v76, %v313
    %v315 = vpop.f32.mrb[0].mxu0
    %v316 = vadd.f32 %v80, %v315
    %v317 = vpop.f32.mrb[0].mxu0
    %v318 = vadd.f32 %v76, %v317
    %v319 = vpop.f32.mrb[0].mxu0
    %v320 = vadd.f32 %v80, %v319
    %321 = vmatprep.mubr.bf16.mxu0 0
    %322 = vmatmul.mubr.bf16.gmra.mrb[0].mxu0 %v105
    %v323 = vpop.f32.mrb[0].mxu0
    %v324 = vadd.f32 %v76, %v323
    %v325 = vpop.f32.mrb[0].mxu0
    %v326 = vadd.f32 %v80, %v325
    %v327 = vpop.f32.mrb[0].mxu0
    %v328 = vpop.f32.mrb[0].mxu0
    %329 = vdwg.mxu0
    %330 = vmatprep.subr.bf16.mxu0 %v208
    %331 = vmatpush1.bf16.msra.mxu0 %v207
    %332 = vmatprep.subr.bf16.mxu0 %v212
    %333 = vmatpush1.bf16.msra.mxu0 %v211
    %334 = vmatprep.subr.bf16.mxu0 %v216
    %335 = vmatpush1.bf16.msra.mxu0 %v215
    %336 = vmatprep.subr.bf16.mxu0 %v220
    %337 = vmatpush1.bf16.msra.mxu0 %v219
    %338 = vmatprep.subr.bf16.mxu0 %v224
    %339 = vmatpush1.bf16.msra.mxu0 %v223
    %340 = vmatprep.subr.bf16.mxu0 %v228
    %341 = vmatpush1.bf16.msra.mxu0 %v227
    %342 = vmatprep.subr.bf16.mxu0 %v232
    %343 = vmatpush1.bf16.msra.mxu0 %v231
    %344 = vmatprep.subr.bf16.mxu0 %v236
    %345 = vmatpush1.bf16.msra.mxu0 %v235
    %346 = vmatprep.subr.bf16.mxu0 0
    %347 = vmatpush1.bf16.msra.mxu0 0
    %348 = vmatprep.subr.bf16.mxu0 0
    %349 = vmatpush1.bf16.msra.mxu0 0
    %350 = vmatprep.subr.bf16.mxu0 0
    %351 = vmatpush1.bf16.msra.mxu0 0
    %352 = vmatprep.subr.bf16.mxu0 0
    %353 = vmatpush1.bf16.msra.mxu0 0
    %354 = vmatprep.subr.bf16.mxu0 0
    %355 = vmatpush1.bf16.msra.mxu0 0
    %356 = vmatprep.subr.bf16.mxu0 0
    %357 = vmatpush1.bf16.msra.mxu0 0
    %358 = vmatprep.subr.bf16.mxu0 0
    %359 = vmatpush1.bf16.msra.mxu0 0
    %360 = vmatprep.subr.bf16.mxu0 0
    %361 = vmatpush1.bf16.msra.mxu0 0
    %362 = vmatprep.mubr.bf16.mxu0 0
    %363 = vmatmul.mubr.bf16.gmra.mrb[0].mxu0 %v103
    %v364 = vpop.f32.mrb[0].mxu0
    %v365 = vadd.f32 %v84, %v364
    %v366 = vpop.f32.mrb[0].mxu0
    %v367 = vadd.f32 %v88, %v366
    %v368 = vpop.f32.mrb[0].mxu0
    %v369 = vadd.f32 %v84, %v368
    %v370 = vpop.f32.mrb[0].mxu0
    %v371 = vadd.f32 %v88, %v370
    %372 = vmatprep.mubr.bf16.mxu0 0
    %373 = vmatmul.mubr.bf16.gmra.mrb[0].mxu0 %v104
    %v374 = vpop.f32.mrb[0].mxu0
    %v375 = vadd.f32 %v84, %v374
    %v376 = vpop.f32.mrb[0].mxu0
    %v377 = vadd.f32 %v88, %v376
    %v378 = vpop.f32.mrb[0].mxu0
    %v379 = vadd.f32 %v84, %v378
    %v380 = vpop.f32.mrb[0].mxu0
    %v381 = vadd.f32 %v88, %v380
    %382 = vmatprep.mubr.bf16.mxu0 0
    %383 = vmatmul.mubr.bf16.gmra.mrb[0].mxu0 %v105
    %v384 = vpop.f32.mrb[0].mxu0
    %v385 = vadd.f32 %v84, %v384
    %v386 = vpop.f32.mrb[0].mxu0
    %v387 = vadd.f32 %v88, %v386
    %v388 = vpop.f32.mrb[0].mxu0
    %v389 = vpop.f32.mrb[0].mxu0
    %390 = vdwg.mxu0
    %v391 = vld [vmem:[%s3] sm:$0xff]
    %v392 = vld [vmem:[%s3 + $0x8] sm:$0xff]
    %v393 = vld [vmem:[%s3 + $0x10] sm:$0xff]
    %v394 = vld [vmem:[%s3 + $0x18] sm:$0xff]
    %v395 = vld [vmem:[%s3 + $0x20] sm:$0xff]
    %v396 = vld [vmem:[%s4] sm:$0xff]
    %v397 = vld [vmem:[%s4 + $0x8] sm:$0xff]
    %v398 = vld [vmem:[%s4 + $0x10] sm:$0xff]
    %v399 = vld [vmem:[%s4 + $0x18] sm:$0xff]
    %v400 = vld [vmem:[%s4 + $0x20] sm:$0xff]
    %v401 = vlaneseq
    %v402 = vand.u32 %v401, 127
    %v403 = vadd.s32 %v402, 128
    %v404 = vadd.s32 %v402, 256
    %v405 = vadd.s32 %v402, 384
    %v406 = vmax.f32 %v304, %v306
    %v407 = vmax.f32 %v406, %v365
    %v408 = vmax.f32 %v407, %v367
    %409 = vmax.xlane.f32.xlu0 %v408
    %v410 = vpop.xlane.xlu0 %409
    %v411 = vmax.f32 %v308, %v310
    %v412 = vmax.f32 %v411, %v369
    %v413 = vmax.f32 %v412, %v371
    %414 = vmax.xlane.f32.xlu0 %v413
    %v415 = vpop.xlane.xlu0 %414
    %v416 = vmax.f32 %v314, %v316
    %v417 = vmax.f32 %v416, %v375
    %v418 = vmax.f32 %v417, %v377
    %419 = vmax.xlane.f32.xlu0 %v418
    %v420 = vpop.xlane.xlu0 %419
    %v421 = vmax.f32 %v318, %v320
    %v422 = vmax.f32 %v421, %v379
    %v423 = vmax.f32 %v422, %v381
    %424 = vmax.xlane.f32.xlu0 %v423
    %v425 = vpop.xlane.xlu0 %424
    %v426 = vmax.f32 %v324, %v326
    %v427 = vmax.f32 %v426, %v385
    %v428 = vmax.f32 %v427, %v387
    %429 = vmax.xlane.f32.xlu0 %v428
    %v430 = vpop.xlane.xlu0 %429
    %vm431 = vcmp.ge.f32.partialorder %v304, %v410
    %vm432 = vcmp.ge.f32.partialorder %v306, %v410
    %vm433 = vcmp.ge.f32.partialorder %v365, %v410
    %vm434 = vcmp.ge.f32.partialorder %v367, %v410
    %vm435 = vcmp.ge.f32.partialorder %v308, %v415
    %vm436 = vcmp.ge.f32.partialorder %v310, %v415
    %vm437 = vcmp.ge.f32.partialorder %v369, %v415
    %vm438 = vcmp.ge.f32.partialorder %v371, %v415
    %vm439 = vcmp.ge.f32.partialorder %v314, %v420
    %vm440 = vcmp.ge.f32.partialorder %v316, %v420
    %vm441 = vcmp.ge.f32.partialorder %v375, %v420
    %vm442 = vcmp.ge.f32.partialorder %v377, %v420
    %vm443 = vcmp.ge.f32.partialorder %v318, %v425
    %vm444 = vcmp.ge.f32.partialorder %v320, %v425
    %vm445 = vcmp.ge.f32.partialorder %v379, %v425
    %vm446 = vcmp.ge.f32.partialorder %v381, %v425
    %vm447 = vcmp.ge.f32.partialorder %v324, %v430
    %vm448 = vcmp.ge.f32.partialorder %v326, %v430
    %vm449 = vcmp.ge.f32.partialorder %v385, %v430
    %vm450 = vcmp.ge.f32.partialorder %v387, %v430
    %v451 = vsel %vm431, %v402, 512
    %v452 = vsel %vm432, %v403, 512
    %v453 = vsel %vm433, %v404, 512
    %v454 = vsel %vm434, %v405, 512
    %v455 = vsel %vm435, %v402, 512
    %v456 = vsel %vm436, %v403, 512
    %v457 = vsel %vm437, %v404, 512
    %v458 = vsel %vm438, %v405, 512
    %v459 = vsel %vm439, %v402, 512
    %v460 = vsel %vm440, %v403, 512
    %v461 = vsel %vm441, %v404, 512
    %v462 = vsel %vm442, %v405, 512
    %v463 = vsel %vm443, %v402, 512
    %v464 = vsel %vm444, %v403, 512
    %v465 = vsel %vm445, %v404, 512
    %v466 = vsel %vm446, %v405, 512
    %v467 = vsel %vm447, %v402, 512
    %v468 = vsel %vm448, %v403, 512
    %v469 = vsel %vm449, %v404, 512
    %v470 = vsel %vm450, %v405, 512
    %vm471 = vcmp.lt.s32.totalorder %v451, %v452
    %v472 = vsel %vm471, %v451, %v452
    %vm473 = vcmp.lt.s32.totalorder %v472, %v453
    %v474 = vsel %vm473, %v472, %v453
    %vm475 = vcmp.lt.s32.totalorder %v474, %v454
    %v476 = vsel %vm475, %v474, %v454
    %v477 = vand.u32 %v476, 65535
    %v478 = vshra.s32 %v476, 16
    %v479 = vcvt.s32.f32 %v477
    %v480 = vcvt.s32.f32 %v478
    %481 = vmin.xlane.f32.xlu0 %v480
    %v482 = vpop.xlane.xlu0 %481
    %vm483 = vcmp.eq.f32.partialorder %v480, %v482
    %v484 = vsel %vm483, %v479, inf
    %485 = vmin.xlane.f32.xlu0 %v484
    %v486 = vpop.xlane.xlu0 %485
    %v487 = vcvt.f32.s32 %v486
    %v488 = vcvt.f32.s32 %v482
    %v489 = vshll.u32 %v488, 16
    %v490 = vadd.s32 %v489, %v487
    %vm491 = vcmp.lt.s32.totalorder %v455, %v456
    %v492 = vsel %vm491, %v455, %v456
    %vm493 = vcmp.lt.s32.totalorder %v492, %v457
    %v494 = vsel %vm493, %v492, %v457
    %vm495 = vcmp.lt.s32.totalorder %v494, %v458
    %v496 = vsel %vm495, %v494, %v458
    %v497 = vand.u32 %v496, 65535
    %v498 = vshra.s32 %v496, 16
    %v499 = vcvt.s32.f32 %v497
    %v500 = vcvt.s32.f32 %v498
    %501 = vmin.xlane.f32.xlu0 %v500
    %v502 = vpop.xlane.xlu0 %501
    %vm503 = vcmp.eq.f32.partialorder %v500, %v502
    %v504 = vsel %vm503, %v499, inf
    %505 = vmin.xlane.f32.xlu0 %v504
    %v506 = vpop.xlane.xlu0 %505
    %v507 = vcvt.f32.s32 %v506
    %v508 = vcvt.f32.s32 %v502
    %v509 = vshll.u32 %v508, 16
    %v510 = vadd.s32 %v509, %v507
    %vm511 = vcmp.lt.s32.totalorder %v459, %v460
    %v512 = vsel %vm511, %v459, %v460
    %vm513 = vcmp.lt.s32.totalorder %v512, %v461
    %v514 = vsel %vm513, %v512, %v461
    %vm515 = vcmp.lt.s32.totalorder %v514, %v462
    %v516 = vsel %vm515, %v514, %v462
    %v517 = vand.u32 %v516, 65535
    %v518 = vshra.s32 %v516, 16
    %v519 = vcvt.s32.f32 %v517
    %v520 = vcvt.s32.f32 %v518
    %521 = vmin.xlane.f32.xlu0 %v520
    %v522 = vpop.xlane.xlu0 %521
    %vm523 = vcmp.eq.f32.partialorder %v520, %v522
    %v524 = vsel %vm523, %v519, inf
    %525 = vmin.xlane.f32.xlu0 %v524
    %v526 = vpop.xlane.xlu0 %525
    %v527 = vcvt.f32.s32 %v526
    %v528 = vcvt.f32.s32 %v522
    %v529 = vshll.u32 %v528, 16
    %v530 = vadd.s32 %v529, %v527
    %vm531 = vcmp.lt.s32.totalorder %v463, %v464
    %v532 = vsel %vm531, %v463, %v464
    %vm533 = vcmp.lt.s32.totalorder %v532, %v465
    %v534 = vsel %vm533, %v532, %v465
    %vm535 = vcmp.lt.s32.totalorder %v534, %v466
    %v536 = vsel %vm535, %v534, %v466
    %v537 = vand.u32 %v536, 65535
    %v538 = vshra.s32 %v536, 16
    %v539 = vcvt.s32.f32 %v537
    %v540 = vcvt.s32.f32 %v538
    %541 = vmin.xlane.f32.xlu0 %v540
    %v542 = vpop.xlane.xlu0 %541
    %vm543 = vcmp.eq.f32.partialorder %v540, %v542
    %v544 = vsel %vm543, %v539, inf
    %545 = vmin.xlane.f32.xlu0 %v544
    %v546 = vpop.xlane.xlu0 %545
    %v547 = vcvt.f32.s32 %v546
    %v548 = vcvt.f32.s32 %v542
    %v549 = vshll.u32 %v548, 16
    %v550 = vadd.s32 %v549, %v547
    %vm551 = vcmp.lt.s32.totalorder %v467, %v468
    %v552 = vsel %vm551, %v467, %v468
    %vm553 = vcmp.lt.s32.totalorder %v552, %v469
    %v554 = vsel %vm553, %v552, %v469
    %vm555 = vcmp.lt.s32.totalorder %v554, %v470
    %v556 = vsel %vm555, %v554, %v470
    %v557 = vand.u32 %v556, 65535
    %v558 = vshra.s32 %v556, 16
    %v559 = vcvt.s32.f32 %v557
    %v560 = vcvt.s32.f32 %v558
    %561 = vmin.xlane.f32.xlu0 %v560
    %v562 = vpop.xlane.xlu0 %561
    %vm563 = vcmp.eq.f32.partialorder %v560, %v562
    %v564 = vsel %vm563, %v559, inf
    %565 = vmin.xlane.f32.xlu0 %v564
    %v566 = vpop.xlane.xlu0 %565
    %v567 = vcvt.f32.s32 %v566
    %v568 = vcvt.f32.s32 %v562
    %v569 = vshll.u32 %v568, 16
    %v570 = vadd.s32 %v569, %v567
    %v571 = vsub.f32 %v304, %v410
    %v572 = vsub.f32 %v306, %v410
    %v573 = vsub.f32 %v365, %v410
    %v574 = vsub.f32 %v367, %v410
    %v575 = vsub.f32 %v308, %v415
    %v576 = vsub.f32 %v310, %v415
    %v577 = vsub.f32 %v369, %v415
    %v578 = vsub.f32 %v371, %v415
    %v579 = vsub.f32 %v314, %v420
    %v580 = vsub.f32 %v316, %v420
    %v581 = vsub.f32 %v375, %v420
    %v582 = vsub.f32 %v377, %v420
    %v583 = vsub.f32 %v318, %v425
    %v584 = vsub.f32 %v320, %v425
    %v585 = vsub.f32 %v379, %v425
    %v586 = vsub.f32 %v381, %v425
    %v587 = vsub.f32 %v324, %v430
    %v588 = vsub.f32 %v326, %v430
    %v589 = vsub.f32 %v385, %v430
    %v590 = vsub.f32 %v387, %v430
    %v591 = vmul.f32 %v571, 1.442695
    %v592 = vpow.pop %v591
    %v593 = vmul.f32 %v572, 1.442695
    %v594 = vpow.pop %v593
    %v595 = vmul.f32 %v573, 1.442695
    %v596 = vpow.pop %v595
    %v597 = vmul.f32 %v574, 1.442695
    %v598 = vpow.pop %v597
    %v599 = vmul.f32 %v575, 1.442695
    %v600 = vpow.pop %v599
    %v601 = vmul.f32 %v576, 1.442695
    %v602 = vpow.pop %v601
    %v603 = vmul.f32 %v577, 1.442695
    %v604 = vpow.pop %v603
    %v605 = vmul.f32 %v578, 1.442695
    %v606 = vpow.pop %v605
    %v607 = vmul.f32 %v579, 1.442695
    %v608 = vpow.pop %v607
    %v609 = vmul.f32 %v580, 1.442695
    %v610 = vpow.pop %v609
    %v611 = vmul.f32 %v581, 1.442695
    %v612 = vpow.pop %v611
    %v613 = vmul.f32 %v582, 1.442695
    %v614 = vpow.pop %v613
    %v615 = vmul.f32 %v583, 1.442695
    %v616 = vpow.pop %v615
    %v617 = vmul.f32 %v584, 1.442695
    %v618 = vpow.pop %v617
    %v619 = vmul.f32 %v585, 1.442695
    %v620 = vpow.pop %v619
    %v621 = vmul.f32 %v586, 1.442695
    %v622 = vpow.pop %v621
    %v623 = vmul.f32 %v587, 1.442695
    %v624 = vpow.pop %v623
    %v625 = vmul.f32 %v588, 1.442695
    %v626 = vpow.pop %v625
    %v627 = vmul.f32 %v589, 1.442695
    %v628 = vpow.pop %v627
    %v629 = vmul.f32 %v590, 1.442695
    %v630 = vpow.pop %v629
    %v631 = vadd.f32 %v592, %v594
    %v632 = vadd.f32 %v631, %v596
    %v633 = vadd.f32 %v632, %v598
    %634 = vadd.xlane.f32.xlu0 %v633
    %v635 = vpop.xlane.xlu0 %634
    %v636 = vadd.f32 %v600, %v602
    %v637 = vadd.f32 %v636, %v604
    %v638 = vadd.f32 %v637, %v606
    %639 = vadd.xlane.f32.xlu0 %v638
    %v640 = vpop.xlane.xlu0 %639
    %v641 = vadd.f32 %v608, %v610
    %v642 = vadd.f32 %v641, %v612
    %v643 = vadd.f32 %v642, %v614
    %644 = vadd.xlane.f32.xlu0 %v643
    %v645 = vpop.xlane.xlu0 %644
    %v646 = vadd.f32 %v616, %v618
    %v647 = vadd.f32 %v646, %v620
    %v648 = vadd.f32 %v647, %v622
    %649 = vadd.xlane.f32.xlu0 %v648
    %v650 = vpop.xlane.xlu0 %649
    %v651 = vadd.f32 %v624, %v626
    %v652 = vadd.f32 %v651, %v628
    %v653 = vadd.f32 %v652, %v630
    %654 = vadd.xlane.f32.xlu0 %v653
    %v655 = vpop.xlane.xlu0 %654
    %v656 = vlog2.pop %v635
    %v657 = vmul.f32 %v656, 0.6931472
    %v658 = vlog2.pop %v640
    %v659 = vmul.f32 %v658, 0.6931472
    %v660 = vlog2.pop %v645
    %v661 = vmul.f32 %v660, 0.6931472
    %v662 = vlog2.pop %v650
    %v663 = vmul.f32 %v662, 0.6931472
    %v664 = vlog2.pop %v655
    %v665 = vmul.f32 %v664, 0.6931472
    %v666 = vadd.f32 %v410, %v657
    %v667 = vadd.f32 %v415, %v659
    %v668 = vadd.f32 %v420, %v661
    %v669 = vadd.f32 %v425, %v663
    %v670 = vadd.f32 %v430, %v665
    %671 = vset.pattern.permute.xlu0 0
    %672 = vperm.xlu0 %671, %v391
    %v673 = vpop.permute.xlu0 %672
    %674 = vset.pattern.permute.xlu0 0
    %675 = vperm.xlu0 %674, %v392
    %v676 = vpop.permute.xlu0 %675
    %677 = vset.pattern.permute.xlu0 0
    %678 = vperm.xlu0 %677, %v393
    %v679 = vpop.permute.xlu0 %678
    %680 = vset.pattern.permute.xlu0 0
    %681 = vperm.xlu0 %680, %v394
    %v682 = vpop.permute.xlu0 %681
    %683 = vset.pattern.permute.xlu0 0
    %684 = vperm.xlu0 %683, %v395
    %v685 = vpop.permute.xlu0 %684
    %vm686 = vcmp.eq.s32.totalorder %v402, %v673
    %vm687 = vcmp.eq.s32.totalorder %v403, %v673
    %vm688 = vcmp.eq.s32.totalorder %v404, %v673
    %vm689 = vcmp.eq.s32.totalorder %v405, %v673
    %vm690 = vcmp.eq.s32.totalorder %v402, %v676
    %vm691 = vcmp.eq.s32.totalorder %v403, %v676
    %vm692 = vcmp.eq.s32.totalorder %v404, %v676
    %vm693 = vcmp.eq.s32.totalorder %v405, %v676
    %vm694 = vcmp.eq.s32.totalorder %v402, %v679
    %vm695 = vcmp.eq.s32.totalorder %v403, %v679
    %vm696 = vcmp.eq.s32.totalorder %v404, %v679
    %vm697 = vcmp.eq.s32.totalorder %v405, %v679
    %vm698 = vcmp.eq.s32.totalorder %v402, %v682
    %vm699 = vcmp.eq.s32.totalorder %v403, %v682
    %vm700 = vcmp.eq.s32.totalorder %v404, %v682
    %vm701 = vcmp.eq.s32.totalorder %v405, %v682
    %vm702 = vcmp.eq.s32.totalorder %v402, %v685
    %vm703 = vcmp.eq.s32.totalorder %v403, %v685
    %vm704 = vcmp.eq.s32.totalorder %v404, %v685
    %vm705 = vcmp.eq.s32.totalorder %v405, %v685
    %v706 = vsel %vm686, %v304, 0.0
    %v707 = vsel %vm687, %v306, 0.0
    %v708 = vsel %vm688, %v365, 0.0
    %v709 = vsel %vm689, %v367, 0.0
    %v710 = vsel %vm690, %v308, 0.0
    %v711 = vsel %vm691, %v310, 0.0
    %v712 = vsel %vm692, %v369, 0.0
    %v713 = vsel %vm693, %v371, 0.0
    %v714 = vsel %vm694, %v314, 0.0
    %v715 = vsel %vm695, %v316, 0.0
    %v716 = vsel %vm696, %v375, 0.0
    %v717 = vsel %vm697, %v377, 0.0
    %v718 = vsel %vm698, %v318, 0.0
    %v719 = vsel %vm699, %v320, 0.0
    %v720 = vsel %vm700, %v379, 0.0
    %v721 = vsel %vm701, %v381, 0.0
    %v722 = vsel %vm702, %v324, 0.0
    %v723 = vsel %vm703, %v326, 0.0
    %v724 = vsel %vm704, %v385, 0.0
    %v725 = vsel %vm705, %v387, 0.0
    %v726 = vadd.f32 %v706, %v707
    %v727 = vadd.f32 %v726, %v708
    %v728 = vadd.f32 %v727, %v709
    %729 = vadd.xlane.f32.xlu0 %v728
    %v730 = vpop.xlane.xlu0 %729
    %v731 = vadd.f32 %v710, %v711
    %v732 = vadd.f32 %v731, %v712
    %v733 = vadd.f32 %v732, %v713
    %734 = vadd.xlane.f32.xlu0 %v733
    %v735 = vpop.xlane.xlu0 %734
    %v736 = vadd.f32 %v714, %v715
    %v737 = vadd.f32 %v736, %v716
    %v738 = vadd.f32 %v737, %v717
    %739 = vadd.xlane.f32.xlu0 %v738
    %v740 = vpop.xlane.xlu0 %739
    %v741 = vadd.f32 %v718, %v719
    %v742 = vadd.f32 %v741, %v720
    %v743 = vadd.f32 %v742, %v721
    %744 = vadd.xlane.f32.xlu0 %v743
    %v745 = vpop.xlane.xlu0 %744
    %v746 = vadd.f32 %v722, %v723
    %v747 = vadd.f32 %v746, %v724
    %v748 = vadd.f32 %v747, %v725
    %749 = vadd.xlane.f32.xlu0 %v748
    %v750 = vpop.xlane.xlu0 %749
    %v751 = vsub.f32 %v666, %v730
    %v752 = vsub.f32 %v667, %v735
    %v753 = vsub.f32 %v668, %v740
    %v754 = vsub.f32 %v669, %v745
    %v755 = vsub.f32 %v670, %v750
    %vm756 = vcmp.ne.s32.totalorder %v391, 4294967196
    %vm757 = vcmp.ne.s32.totalorder %v392, 4294967196
    %vm758 = vcmp.ne.s32.totalorder %v393, 4294967196
    %vm759 = vcmp.ne.s32.totalorder %v394, 4294967196
    %vm760 = vcmp.ne.s32.totalorder %v395, 4294967196
    %vm761 = vcmp.ne.s32.totalorder %v396, 4294967196
    %vm762 = vcmp.ne.s32.totalorder %v397, 4294967196
    %vm763 = vcmp.ne.s32.totalorder %v398, 4294967196
    %vm764 = vcmp.ne.s32.totalorder %v399, 4294967196
    %vm765 = vcmp.ne.s32.totalorder %v400, 4294967196
    %vm766 = vcmp.eq.s32.totalorder %v490, %v396
    %vm767 = vcmp.eq.s32.totalorder %v510, %v397
    %vm768 = vcmp.eq.s32.totalorder %v530, %v398
    %vm769 = vcmp.eq.s32.totalorder %v550, %v399
    %vm770 = vcmp.eq.s32.totalorder %v570, %v400
    %vm771 = vmand %vm766, %vm761
    %vm772 = vmand %vm767, %vm762
    %vm773 = vmand %vm768, %vm763
    %vm774 = vmand %vm769, %vm764
    %vm775 = vmand %vm770, %vm765
    %s776 = sld [smem:[#allocation2]]
    %v777 = vsel %vm756, %v751, 0.0
    %v778 = vsel %vm757, %v752, 0.0
    %v779 = vsel %vm758, %v753, 0.0
    %v780 = vsel %vm759, %v754, 0.0
    %v781 = vsel %vm760, %v755, 0.0
    %vm782 = vcmask 7168
    %v783 = vsel %vm782, %v777, 0.0
    %v784 = vsel %vm782, %v778, 0.0
    %v785 = vadd.f32 %v783, %v784
    %v786 = vsel %vm782, %v779, 0.0
    %v787 = vadd.f32 %v785, %v786
    %v788 = vsel %vm782, %v780, 0.0
    %v789 = vadd.f32 %v787, %v788
    %v790 = vsel %vm782, %v781, 0.0
    %v791 = vadd.f32 %v789, %v790
    %792 = vadd.xlane.f32.xlu0 %v791
    %v793 = vpop.xlane.xlu0 %792
    %v794 = vrot.slane %v793, 4
    %v795 = vadd.f32 %v793, %v794
    %v796 = vrot.slane %v795, 2
    %v797 = vadd.f32 %v795, %v796
    %v798 = vrot.slane %v797, 1
    %v799 = vadd.f32 %v797, %v798
    %s800 = vtos %v799
    %s801 = sadd.f32 %s776, %s800
    %s802 = scalar_lea.smem [#allocation2], 0
    %803 = sst [smem:[%s802]] %s801
    %s804 = sld [smem:[#allocation2 + $0x1]]
    %v805 = vsel %vm756, 1, 0
    %v806 = vsel %vm757, 1, 0
    %v807 = vsel %vm758, 1, 0
    %v808 = vsel %vm759, 1, 0
    %v809 = vsel %vm760, 1, 0
    %v810 = vcvt.s32.f32 %v805
    %v811 = vcvt.s32.f32 %v806
    %v812 = vcvt.s32.f32 %v807
    %v813 = vcvt.s32.f32 %v808
    %v814 = vcvt.s32.f32 %v809
    %v815 = vsel %vm782, %v810, 0.0
    %v816 = vsel %vm782, %v811, 0.0
    %v817 = vadd.f32 %v815, %v816
    %v818 = vsel %vm782, %v812, 0.0
    %v819 = vadd.f32 %v817, %v818
    %v820 = vsel %vm782, %v813, 0.0
    %v821 = vadd.f32 %v819, %v820
    %v822 = vsel %vm782, %v814, 0.0
    %v823 = vadd.f32 %v821, %v822
    %824 = vadd.xlane.f32.xlu0 %v823
    %v825 = vpop.xlane.xlu0 %824
    %v826 = vrot.slane %v825, 4
    %v827 = vadd.f32 %v825, %v826
    %v828 = vrot.slane %v827, 2
    %v829 = vadd.f32 %v827, %v828
    %v830 = vrot.slane %v829, 1
    %v831 = vadd.f32 %v829, %v830
    %s832 = vtos %v831
    %s833 = sadd.f32 %s804, %s832
    %s834 = scalar_lea.smem [#allocation2], 1
    %835 = sst [smem:[%s834]] %s833
    %s836 = sld [smem:[#allocation2 + $0x2]]
    %v837 = vsel %vm771, 1, 0
    %v838 = vsel %vm772, 1, 0
    %v839 = vsel %vm773, 1, 0
    %v840 = vsel %vm774, 1, 0
    %v841 = vsel %vm775, 1, 0
    %v842 = vcvt.s32.f32 %v837
    %v843 = vcvt.s32.f32 %v838
    %v844 = vcvt.s32.f32 %v839
    %v845 = vcvt.s32.f32 %v840
    %v846 = vcvt.s32.f32 %v841
    %v847 = vsel %vm782, %v842, 0.0
    %v848 = vsel %vm782, %v843, 0.0
    %v849 = vadd.f32 %v847, %v848
    %v850 = vsel %vm782, %v844, 0.0
    %v851 = vadd.f32 %v849, %v850
    %v852 = vsel %vm782, %v845, 0.0
    %v853 = vadd.f32 %v851, %v852
    %v854 = vsel %vm782, %v846, 0.0
    %v855 = vadd.f32 %v853, %v854
    %856 = vadd.xlane.f32.xlu0 %v855
    %v857 = vpop.xlane.xlu0 %856
    %v858 = vrot.slane %v857, 4
    %v859 = vadd.f32 %v857, %v858
    %v860 = vrot.slane %v859, 2
    %v861 = vadd.f32 %v859, %v860
    %v862 = vrot.slane %v861, 1
    %v863 = vadd.f32 %v861, %v862
    %s864 = vtos %v863
    %s865 = sadd.f32 %s836, %s864
    %s866 = scalar_lea.smem [#allocation2], 2
    %867 = sst [smem:[%s866]] %s865
    %s868 = sld [smem:[#allocation2 + $0x3]]
    %v869 = vsel %vm761, 1, 0
    %v870 = vsel %vm762, 1, 0
    %v871 = vsel %vm763, 1, 0
    %v872 = vsel %vm764, 1, 0
    %v873 = vsel %vm765, 1, 0
    %v874 = vcvt.s32.f32 %v869
    %v875 = vcvt.s32.f32 %v870
    %v876 = vcvt.s32.f32 %v871
    %v877 = vcvt.s32.f32 %v872
    %v878 = vcvt.s32.f32 %v873
    %v879 = vsel %vm782, %v874, 0.0
    %v880 = vsel %vm782, %v875, 0.0
    %v881 = vadd.f32 %v879, %v880
    %v882 = vsel %vm782, %v876, 0.0
    %v883 = vadd.f32 %v881, %v882
    %v884 = vsel %vm782, %v877, 0.0
    %v885 = vadd.f32 %v883, %v884
    %v886 = vsel %vm782, %v878, 0.0
    %v887 = vadd.f32 %v885, %v886
    %888 = vadd.xlane.f32.xlu0 %v887
    %v889 = vpop.xlane.xlu0 %888
    %v890 = vrot.slane %v889, 4
    %v891 = vadd.f32 %v889, %v890
    %v892 = vrot.slane %v891, 2
    %v893 = vadd.f32 %v891, %v892
    %v894 = vrot.slane %v893, 1
    %v895 = vadd.f32 %v893, %v894
    %s896 = vtos %v895
    %s897 = sadd.f32 %s868, %s896
    %s898 = scalar_lea.smem [#allocation2], 3
    %899 = sst [smem:[%s898]] %s897
    // Predicated region
    $region26: #{merg_forward.3} parent=1 // pred_check
      _
    $region27: #{merg_forward.3} parent=1 // pred_check_branch
      %901 = sbr.rel (0) target = $region29
    $region28: #{merg_forward.3} parent=1 // pred_region
      %s903 = ssub.s32 16, 16
      %904 = vsyncadd [#allocation3], %s903
      %s906 = sshll.u32 %s5, 4
      %s907 = int_to_ptr.vmem [resolvable:$true] %s906
      %909 = dma.smem_to_vmem [#allocation2], 16, %s907, [#allocation3]
    $region29: #{merg_forward.3} parent=1 // pred_fallthru
      _
    // Predicated region
    $region30: #{merg_forward.3} parent=1 // pred_check
      _
    $region31: #{merg_forward.3} parent=1 // pred_check_branch
      %911 = sbr.rel (0) target = $region33
    $region32: #{merg_forward.3} parent=1 // pred_region
      %912 = dma.done [#allocation3], 16
    $region33: #{merg_forward.3} parent=1 // pred_fallthru
      _
    %913 = sfence
    %914 = vsyncpa [#allocation3], 1

</llo_original>
